<compile_context>
chip_gen: v5e
topology: v5e:2x2
jax: 0.10.0
libtpu: 0.0.40
codegen_flags: <defaults>
</compile_context>

<pallas_src>
import math

import jax
import jax.numpy as jnp
from jax.experimental import pallas as pl
from jax.experimental.pallas import tpu as pltpu


# ----------------------------- Pallas kernel ------------------------------- #
def agat_fused_kernel(x0_hbm, rg_ref, vg_ref, thi_ref, thj_ref, we_ref, b_ref,
                      R_hbm, RT_hbm, C_hbm,
                      out_ref,
                      x_state, R_s, RT_s, C_s):
    """All L AGAT layers fused; one grid step per layer (grid axis 0 = layer).

    Node state is "type-wide": x_state[n, t*d + k] == x[t, n, k], so every
    gather / scatter / projection is one wide MXU matmul batched over all types.

    x0_hbm : (N, T*d)    initial node features tiled over types (HBM, copied once)
    rg_ref : (1, E, T)   per-layer logit term  theta_g[t] . ef_l[edge_type[e]]
    vg_ref : (1, E, T*d) per-layer sigmoid gate gathered by edge_type, tiled over T
    thi/thj: (1, T*d, T) per-layer block-diagonal theta_hi / theta_hj
    we_ref : (1, T*d, T*d) per-layer block-diagonal we
    b_ref  : (T, T*d)    0/1 broadcast matrix: (., T) @ B broadcasts over d per type
    R/RT/C : one-hot(row) (E,N), its transpose (N,E), one-hot(col) (E,N)  [HBM, f32]
    out_ref: (N, T*d)    final-layer output (written only on the last grid step)
    x_state, R_s, RT_s, C_s : VMEM scratch persisting across layers
    """
    f32 = jnp.float32
    l = pl.program_id(0)
    n_layers = pl.num_programs(0)

    # One-time setup: DMA the layer-invariant operands into single-buffered VMEM
    # scratch (no per-layer re-fetch, no per-layer dtype conversion).
    @pl.when(l == 0)
    def _init():
        pltpu.sync_copy(x0_hbm, x_state)
        pltpu.sync_copy(R_hbm, R_s)
        pltpu.sync_copy(RT_hbm, RT_s)
        pltpu.sync_copy(C_hbm, C_s)

    x = x_state[...]                    # (N, T*d) f32
    R = R_s[...]                        # (E, N)
    RT = RT_s[...]                      # (N, E)
    C = C_s[...]                        # (E, N)
    thi = thi_ref[0]                    # (T*d, T)
    thj = thj_ref[0]                    # (T*d, T)
    we_bd = we_ref[0]                   # (T*d, T*d)
    rg_e = rg_ref[0]                    # (E, T)
    vg_e = vg_ref[0]                    # (E, T*d)
    Bc = b_ref[...]                     # (T, T*d)

    # --- attention logits for all types at once: (E, T) ---
    hi = jnp.dot(x, thi, preferred_element_type=f32)            # (N, T)
    hj = jnp.dot(x, thj, preferred_element_type=f32)            # (N, T)
    r = (rg_e
         + jnp.dot(R, hi, preferred_element_type=f32)           # gather by row
         + jnp.dot(C, hj, preferred_element_type=f32))          # gather by col

    # --- scatter_softmax over destination-node groups, node-level normalization ---
    m = jnp.max(r, axis=0, keepdims=True)                       # (1, T) per-type shift
    e_exp = jnp.exp(r - m)                                      # (E, T)
    denom = jnp.dot(RT, e_exp, preferred_element_type=f32)      # (N, T) per-group sums

    # --- values for all types in one wide matmul chain: (E, T*d) ---
    xw = jnp.dot(x, we_bd, preferred_element_type=f32)          # (N, T*d)  x @ we (all types)
    v_h = jnp.dot(C, xw, preferred_element_type=f32)            # (E, T*d)  gather by col
    gate = jnp.dot(e_exp, Bc, preferred_element_type=f32) * vg_e  # (E, T*d)
    weighted = gate * v_h                                       # (E, T*d)

    # --- unnormalized scatter-add, then node-level softmax normalization ---
    scat = jnp.dot(RT, weighted, preferred_element_type=f32)    # (N, T*d)
    denom = jnp.where(denom > 0.0, denom, 1.0)                  # isolated nodes -> 0 output
    inv = pl.reciprocal(denom, approx=True)                     # (N, T), EUP slot
    out_wide = scat * jnp.dot(inv, Bc, preferred_element_type=f32)   # (N, T*d)

    # Final layer only: one lane-dense store.
    @pl.when(l == n_layers - 1)
    def _store():
        out_ref[...] = out_wide

    # Inter-layer residual + relu (dropout(p=0.1) = identity at inference).
    @pl.when(l < n_layers - 1)
    def _carry():
        x_state[...] = x + jnp.maximum(out_wide, 0.0)


# ------------------------------ JAX wrapper --------------------------------- #
def agat_forward(x, edge_index, edge_type, edge_feature, params, type_num):
    """AGAT.forward (inference: dropout = identity), mask=None."""
    N, d = x.shape
    T = type_num
    Td = T * d
    L = len(params)
    E = edge_type.shape[0]
    et = edge_feature.shape[0]
    row, col = edge_index[0], edge_index[1]
    f32 = jnp.float32

    # Dense one-hot adjacency (f32; DMA'd once into VMEM scratch by the kernel).
    R = jax.nn.one_hot(row, N, dtype=f32)          # (E, N)
    C = jax.nn.one_hot(col, N, dtype=f32)          # (E, N)
    RT = R.T                                       # (N, E)

    eye_T = jnp.eye(T, dtype=f32)
    # 0/1 matrix broadcasting a per-type column into its d-wide block.
    Bcast = jnp.broadcast_to(eye_T[:, :, None], (T, T, d)).reshape(T, Td)   # (T, T*d)

    # Hoisted x-independent per-layer operands (edge-feature chain, edge-type
    # gathers, block-diagonal weight folding) in plain XLA — all tiny.
    rg_list, vg_list, thiw, thjw, webd = [], [], [], [], []
    ef = edge_feature.astype(f32)
    for p in params:
        ef_new = ef @ p["wr"]
        rg_list.append((ef @ p["theta_g"].T)[edge_type])              # (E, T)
        vg_list.append(jnp.tile(jax.nn.sigmoid(ef_new)[edge_type], (1, T)))  # (E, T*d)
        thiw.append((p["theta_hi"][:, :, None] * eye_T[:, None, :]).reshape(Td, T))
        thjw.append((p["theta_hj"][:, :, None] * eye_T[:, None, :]).reshape(Td, T))
        webd.append((eye_T[:, None, :, None] * p["we"][None, :, None, :]).reshape(Td, Td))
        ef = jax.nn.relu(ef_new)

    rg_all = jnp.stack(rg_list).astype(f32)        # (L, E, T)
    vg_all = jnp.stack(vg_list).astype(f32)        # (L, E, T*d)
    thi_all = jnp.stack(thiw).astype(f32)          # (L, T*d, T)
    thj_all = jnp.stack(thjw).astype(f32)          # (L, T*d, T)
    we_all = jnp.stack(webd).astype(f32)           # (L, T*d, T*d)

    x0_wide = jnp.tile(x.astype(f32), (1, T))      # (N, T*d)  x expanded over types

    flops_per_layer = 2 * (
        2 * N * Td * T          # hi, hj projections
        + 2 * E * N * T         # row/col logit gathers
        + N * E * T             # per-node softmax denominator
        + N * Td * Td           # x @ we (all types)
        + E * N * Td            # value gather by col
        + E * T * Td            # e_exp broadcast matmul
        + N * E * Td            # scatter-add
        + N * T * Td            # reciprocal broadcast matmul
    ) + 6 * E * Td
    bytes_accessed = int(4 * (N * Td                                   # x0
                              + L * (E * T + E * Td + 2 * Td * T + Td * Td)
                              + T * Td + 3 * E * N + N * Td))
    cost = pl.CostEstimate(flops=int(L * flops_per_layer),
                           transcendentals=int(L * (E * T + N * T)),
                           bytes_accessed=bytes_accessed)

    resident_bytes = 4 * (
        3 * E * N + N * Td                              # adjacency + x_state scratch
        + 2 * (E * T + E * Td + 2 * Td * T + Td * Td)   # double-buffered per-layer params
        + 2 * T * Td + 2 * N * Td                       # broadcast matrix + output
        + 4 * E * Td + 4 * N * Td + 4 * E * T)          # in-flight intermediates headroom
    vmem_limit = int(min(max(4 * resident_bytes, 32 * 2**20), 60 * 2**20))

    in_specs = [
        pl.BlockSpec(memory_space=pl.ANY),                # x0_wide (copied once)
        pl.BlockSpec((1, E, T), lambda l: (l, 0, 0)),     # rg_all (per-layer)
        pl.BlockSpec((1, E, Td), lambda l: (l, 0, 0)),    # vg_all (per-layer)
        pl.BlockSpec((1, Td, T), lambda l: (l, 0, 0)),    # theta_hi block-diag
        pl.BlockSpec((1, Td, T), lambda l: (l, 0, 0)),    # theta_hj block-diag
        pl.BlockSpec((1, Td, Td), lambda l: (l, 0, 0)),   # we block-diag
        pl.BlockSpec((T, Td), lambda l: (0, 0)),          # broadcast matrix
        pl.BlockSpec(memory_space=pl.ANY),                # R   (copied once)
        pl.BlockSpec(memory_space=pl.ANY),                # R^T (copied once)
        pl.BlockSpec(memory_space=pl.ANY),                # C   (copied once)
    ]
    out_specs = pl.BlockSpec((N, Td), lambda l: (0, 0))

    out_wide = pl.pallas_call(
        agat_fused_kernel,
        out_shape=jax.ShapeDtypeStruct((N, Td), f32),
        grid=(L,),
        in_specs=in_specs,
        out_specs=out_specs,
        scratch_shapes=[pltpu.VMEM((N, Td), f32),    # x_state
                        pltpu.VMEM((E, N), f32),     # R
                        pltpu.VMEM((N, E), f32),     # R^T
                        pltpu.VMEM((E, N), f32)],    # C
        cost_estimate=cost,
        compiler_params=pltpu.CompilerParams(
            dimension_semantics=("arbitrary",),      # layers are sequential
            vmem_limit_bytes=vmem_limit),
    )(x0_wide, rg_all, vg_all, thi_all, thj_all, we_all, Bcast, R, RT, C)

    # Lane-dense (N, T*d) kernel output -> module layout (T, N, d) in plain XLA.
    return out_wide.reshape(N, T, d).transpose(1, 0, 2)


# ----------------------------- pure-JAX reference --------------------------- #
def _ref_layer(x, row, col, etype, ef, p, N):
    tg, thi, thj, wr, we = p["theta_g"], p["theta_hi"], p["theta_hj"], p["wr"], p["we"]
    r_g = jnp.sum(ef[None, :, :] * tg[:, None, :], -1)[:, etype]   # (T, E)
    r_hi = jnp.sum(x * thi[:, None, :], -1)[:, row]                # (T, E)
    r_hj = jnp.sum(x * thj[:, None, :], -1)[:, col]                # (T, E)
    r = r_g + r_hi + r_hj
    rT = r.T                                                       # (E, T)
    mx = jax.ops.segment_max(rT, row, num_segments=N)              # (N, T)
    ex = jnp.exp(rT - mx[row])
    den = jax.ops.segment_sum(ex, row, num_segments=N)
    soft = (ex / den[row]).T                                       # (T, E)
    ef_new = ef @ wr
    vg = jax.nn.sigmoid(ef_new)[etype]                             # (E, d)
    vh = (x @ we)[:, col]                                          # (T, E, d)
    out_e = soft[:, :, None] * (vg[None] * vh)                     # (T, E, d)
    out = jax.ops.segment_sum(jnp.swapaxes(out_e, 0, 1), row, num_segments=N)
    return jnp.swapaxes(out, 0, 1), ef_new


def _ref_agat(x, edge_index, edge_type, edge_feature, params, type_num):
    N, d = x.shape
    T = type_num
    L = len(params)
    row, col = edge_index[0], edge_index[1]
    xT = jnp.broadcast_to(x[None], (T, N, d))
    ef = edge_feature
    for i in range(L):
        x_prev = xT
        x_new, ef_new = _ref_layer(xT, row, col, edge_type, ef, params[i], N)
        if i == L - 1:
            return x_new
        xT = x_prev + jax.nn.relu(x_new)
        ef = jax.nn.relu(ef_new)
    return xT


# ---------------------------------- main ------------------------------------ #
def _xavier_uniform(key, shape):
    fan_out, fan_in = shape[0], shape[1]
    bound = math.sqrt(6.0 / (fan_in + fan_out))
    return jax.random.uniform(key, shape, jnp.float32, -bound, bound)


if __name__ == "__main__":
    T, N, d, E, et, L = 3, 16, 32, 48, 5, 2

    key = jax.random.PRNGKey(0)
    keys = jax.random.split(key, 8)
    x = jax.random.normal(keys[0], (N, d), jnp.float32)
    row = jnp.arange(E, dtype=jnp.int32) % N            # every node receives edges
    col = jax.random.randint(keys[1], (E,), 0, N, jnp.int32)
    edge_index = jnp.stack([row, col])                  # (2, E)
    edge_type = jax.random.randint(keys[2], (E,), 0, et, jnp.int32)
    edge_feature = jax.random.normal(keys[3], (et, d), jnp.float32)

    params = []
    k = keys[4]
    for _ in range(L):
        k, k1, k2, k3, k4, k5 = jax.random.split(k, 6)
        params.append(dict(
            theta_g=_xavier_uniform(k1, (T, d)),
            theta_hi=_xavier_uniform(k2, (T, d)),
            theta_hj=_xavier_uniform(k3, (T, d)),
            we=_xavier_uniform(k4, (d, d)),
            wr=_xavier_uniform(k5, (d, d)),
        ))

    out = agat_forward(x, edge_index, edge_type, edge_feature, params, T)
    out = jax.block_until_ready(out)

    ref = _ref_agat(x, edge_index, edge_type, edge_feature, params, T)
    assert out.shape == (T, N, d)
    # Tolerance loosened (vs 1e-4) for pl.reciprocal(approx=True) in the softmax.
    assert jnp.allclose(out, ref, rtol=1e-2, atol=1e-2), "mismatch vs reference"

    print("KERNEL_OK")
</pallas_src>

<mosaic_0001>
module attributes {stable_mosaic.version = 11 : i64} {
  func.func @agat_fused_kernel(%arg0: i32, %arg1: memref<16x96xf32, #tpu.memory_space<any>>, %arg2: memref<1x48x3xf32, #tpu.memory_space<vmem>>, %arg3: memref<1x48x96xf32, #tpu.memory_space<vmem>>, %arg4: memref<1x96x3xf32, #tpu.memory_space<vmem>>, %arg5: memref<1x96x3xf32, #tpu.memory_space<vmem>>, %arg6: memref<1x96x96xf32, #tpu.memory_space<vmem>>, %arg7: memref<3x96xf32, #tpu.memory_space<vmem>>, %arg8: memref<48x16xf32, #tpu.memory_space<any>>, %arg9: memref<16x48xf32, #tpu.memory_space<any>>, %arg10: memref<48x16xf32, #tpu.memory_space<any>>, %arg11: memref<16x96xf32, #tpu.memory_space<vmem>>, %arg12: memref<16x96xf32, #tpu.memory_space<vmem>>, %arg13: memref<48x16xf32, #tpu.memory_space<vmem>>, %arg14: memref<16x48xf32, #tpu.memory_space<vmem>>, %arg15: memref<48x16xf32, #tpu.memory_space<vmem>>) attributes {dimension_semantics = [#tpu.dimension_semantics<arbitrary>], iteration_bounds = array<i64: 2>, scalar_prefetch = 0 : i64, scratch_operands = 4 : i64, tpu.core_type = #tpu.core_type<tc>, window_params = [{}, {transform_indices = @transform_1, window_bounds = array<i64: 1, 48, 3>}, {transform_indices = @transform_2, window_bounds = array<i64: 1, 48, 96>}, {transform_indices = @transform_3, window_bounds = array<i64: 1, 96, 3>}, {transform_indices = @transform_4, window_bounds = array<i64: 1, 96, 3>}, {transform_indices = @transform_5, window_bounds = array<i64: 1, 96, 96>}, {pipeline_mode = #tpu.pipeline_mode<synchronous>, transform_indices = @transform_6, window_bounds = array<i64: 3, 96>}, {}, {}, {}, {pipeline_mode = #tpu.pipeline_mode<synchronous>, transform_indices = @transform_10, window_bounds = array<i64: 16, 96>}]} {
    %c0_i32 = arith.constant 0 : i32
    %0 = arith.cmpi eq, %arg0, %c0_i32 : i32
    %1 = arith.extui %0 : i1 to i32
    %c0_i32_0 = arith.constant 0 : i32
    %2 = arith.cmpi ne, %1, %c0_i32_0 : i32
    scf.if %2 {
      "tpu.region"() ({
        %49 = tpu.sem_alloc : memref<!tpu.dma_semaphore, #tpu.memory_space<semaphore_mem>>
        tpu.enqueue_dma source(%arg1 : memref<16x96xf32, #tpu.memory_space<any>>) target(%arg12 : memref<16x96xf32, #tpu.memory_space<vmem>>) target_semaphore(%49 : memref<!tpu.dma_semaphore, #tpu.memory_space<semaphore_mem>>)
        tpu.wait_dma2 semaphore(%49 : memref<!tpu.dma_semaphore, #tpu.memory_space<semaphore_mem>>) src(%arg1 : memref<16x96xf32, #tpu.memory_space<any>>) dst(%arg12 : memref<16x96xf32, #tpu.memory_space<vmem>>)
        tpu.yield
      }) : () -> ()
      "tpu.region"() ({
        %49 = tpu.sem_alloc : memref<!tpu.dma_semaphore, #tpu.memory_space<semaphore_mem>>
        tpu.enqueue_dma source(%arg8 : memref<48x16xf32, #tpu.memory_space<any>>) target(%arg13 : memref<48x16xf32, #tpu.memory_space<vmem>>) target_semaphore(%49 : memref<!tpu.dma_semaphore, #tpu.memory_space<semaphore_mem>>)
        tpu.wait_dma2 semaphore(%49 : memref<!tpu.dma_semaphore, #tpu.memory_space<semaphore_mem>>) src(%arg8 : memref<48x16xf32, #tpu.memory_space<any>>) dst(%arg13 : memref<48x16xf32, #tpu.memory_space<vmem>>)
        tpu.yield
      }) : () -> ()
      "tpu.region"() ({
        %49 = tpu.sem_alloc : memref<!tpu.dma_semaphore, #tpu.memory_space<semaphore_mem>>
        tpu.enqueue_dma source(%arg9 : memref<16x48xf32, #tpu.memory_space<any>>) target(%arg14 : memref<16x48xf32, #tpu.memory_space<vmem>>) target_semaphore(%49 : memref<!tpu.dma_semaphore, #tpu.memory_space<semaphore_mem>>)
        tpu.wait_dma2 semaphore(%49 : memref<!tpu.dma_semaphore, #tpu.memory_space<semaphore_mem>>) src(%arg9 : memref<16x48xf32, #tpu.memory_space<any>>) dst(%arg14 : memref<16x48xf32, #tpu.memory_space<vmem>>)
        tpu.yield
      }) : () -> ()
      "tpu.region"() ({
        %49 = tpu.sem_alloc : memref<!tpu.dma_semaphore, #tpu.memory_space<semaphore_mem>>
        tpu.enqueue_dma source(%arg10 : memref<48x16xf32, #tpu.memory_space<any>>) target(%arg15 : memref<48x16xf32, #tpu.memory_space<vmem>>) target_semaphore(%49 : memref<!tpu.dma_semaphore, #tpu.memory_space<semaphore_mem>>)
        tpu.wait_dma2 semaphore(%49 : memref<!tpu.dma_semaphore, #tpu.memory_space<semaphore_mem>>) src(%arg10 : memref<48x16xf32, #tpu.memory_space<any>>) dst(%arg15 : memref<48x16xf32, #tpu.memory_space<vmem>>)
        tpu.yield
      }) : () -> ()
    } else {
    }
    %c0 = arith.constant 0 : index
    %c0_1 = arith.constant 0 : index
    %3 = vector.load %arg12[%c0, %c0_1] : memref<16x96xf32, #tpu.memory_space<vmem>>, vector<16x96xf32>
    %c0_2 = arith.constant 0 : index
    %c0_3 = arith.constant 0 : index
    %4 = vector.load %arg13[%c0_2, %c0_3] : memref<48x16xf32, #tpu.memory_space<vmem>>, vector<48x16xf32>
    %c0_4 = arith.constant 0 : index
    %c0_5 = arith.constant 0 : index
    %5 = vector.load %arg14[%c0_4, %c0_5] : memref<16x48xf32, #tpu.memory_space<vmem>>, vector<16x48xf32>
    %c0_6 = arith.constant 0 : index
    %c0_7 = arith.constant 0 : index
    %6 = vector.load %arg15[%c0_6, %c0_7] : memref<48x16xf32, #tpu.memory_space<vmem>>, vector<48x16xf32>
    %c0_8 = arith.constant 0 : index
    %c0_9 = arith.constant 0 : index
    %c0_10 = arith.constant 0 : index
    %7 = vector.load %arg4[%c0_8, %c0_9, %c0_10] : memref<1x96x3xf32, #tpu.memory_space<vmem>>, vector<1x96x3xf32>
    %8 = vector.shape_cast %7 : vector<1x96x3xf32> to vector<96x3xf32>
    %c0_11 = arith.constant 0 : index
    %c0_12 = arith.constant 0 : index
    %c0_13 = arith.constant 0 : index
    %9 = vector.load %arg5[%c0_11, %c0_12, %c0_13] : memref<1x96x3xf32, #tpu.memory_space<vmem>>, vector<1x96x3xf32>
    %10 = vector.shape_cast %9 : vector<1x96x3xf32> to vector<96x3xf32>
    %c0_14 = arith.constant 0 : index
    %c0_15 = arith.constant 0 : index
    %c0_16 = arith.constant 0 : index
    %11 = vector.load %arg6[%c0_14, %c0_15, %c0_16] : memref<1x96x96xf32, #tpu.memory_space<vmem>>, vector<1x96x96xf32>
    %12 = vector.shape_cast %11 : vector<1x96x96xf32> to vector<96x96xf32>
    %c0_17 = arith.constant 0 : index
    %c0_18 = arith.constant 0 : index
    %c0_19 = arith.constant 0 : index
    %13 = vector.load %arg2[%c0_17, %c0_18, %c0_19] : memref<1x48x3xf32, #tpu.memory_space<vmem>>, vector<1x48x3xf32>
    %14 = vector.shape_cast %13 : vector<1x48x3xf32> to vector<48x3xf32>
    %c0_20 = arith.constant 0 : index
    %c0_21 = arith.constant 0 : index
    %c0_22 = arith.constant 0 : index
    %15 = vector.load %arg3[%c0_20, %c0_21, %c0_22] : memref<1x48x96xf32, #tpu.memory_space<vmem>>, vector<1x48x96xf32>
    %16 = vector.shape_cast %15 : vector<1x48x96xf32> to vector<48x96xf32>
    %c0_23 = arith.constant 0 : index
    %c0_24 = arith.constant 0 : index
    %17 = vector.load %arg7[%c0_23, %c0_24] : memref<3x96xf32, #tpu.memory_space<vmem>>, vector<3x96xf32>
    %cst = arith.constant dense<0.000000e+00> : vector<16x3xf32>
    %18 = tpu.matmul %3, %8, %cst {dimension_numbers = #tpu.dot_dimension_numbers<[1], [0], [0], [1], [0, 0, 1, 1], [], []>} : vector<16x96xf32>, vector<96x3xf32>, vector<16x3xf32> -> vector<16x3xf32>
    %cst_25 = arith.constant dense<0.000000e+00> : vector<16x3xf32>
    %19 = tpu.matmul %3, %10, %cst_25 {dimension_numbers = #tpu.dot_dimension_numbers<[1], [0], [0], [1], [0, 0, 1, 1], [], []>} : vector<16x96xf32>, vector<96x3xf32>, vector<16x3xf32> -> vector<16x3xf32>
    %cst_26 = arith.constant dense<0.000000e+00> : vector<48x3xf32>
    %20 = tpu.matmul %4, %18, %cst_26 {dimension_numbers = #tpu.dot_dimension_numbers<[1], [0], [0], [1], [0, 0, 1, 1], [], []>} : vector<48x16xf32>, vector<16x3xf32>, vector<48x3xf32> -> vector<48x3xf32>
    %21 = arith.addf %14, %20 : vector<48x3xf32>
    %cst_27 = arith.constant dense<0.000000e+00> : vector<48x3xf32>
    %22 = tpu.matmul %6, %19, %cst_27 {dimension_numbers = #tpu.dot_dimension_numbers<[1], [0], [0], [1], [0, 0, 1, 1], [], []>} : vector<48x16xf32>, vector<16x3xf32>, vector<48x3xf32> -> vector<48x3xf32>
    %23 = arith.addf %21, %22 : vector<48x3xf32>
    %cst_28 = arith.constant dense<0xFF800000> : vector<3xf32>
    %24 = vector.multi_reduction <maximumf>, %23, %cst_28 [0] : vector<48x3xf32> to vector<3xf32>
    %25 = vector.shape_cast %24 : vector<3xf32> to vector<1x3xf32>
    %26 = vector.broadcast %25 : vector<1x3xf32> to vector<48x3xf32>
    %27 = arith.subf %23, %26 : vector<48x3xf32>
    %28 = math.exp %27 : vector<48x3xf32>
    %cst_29 = arith.constant dense<0.000000e+00> : vector<16x3xf32>
    %29 = tpu.matmul %5, %28, %cst_29 {dimension_numbers = #tpu.dot_dimension_numbers<[1], [0], [0], [1], [0, 0, 1, 1], [], []>} : vector<16x48xf32>, vector<48x3xf32>, vector<16x3xf32> -> vector<16x3xf32>
    %cst_30 = arith.constant dense<0.000000e+00> : vector<16x96xf32>
    %30 = tpu.matmul %3, %12, %cst_30 {dimension_numbers = #tpu.dot_dimension_numbers<[1], [0], [0], [1], [0, 0, 1, 1], [], []>} : vector<16x96xf32>, vector<96x96xf32>, vector<16x96xf32> -> vector<16x96xf32>
    %cst_31 = arith.constant dense<0.000000e+00> : vector<48x96xf32>
    %31 = tpu.matmul %6, %30, %cst_31 {dimension_numbers = #tpu.dot_dimension_numbers<[1], [0], [0], [1], [0, 0, 1, 1], [], []>} : vector<48x16xf32>, vector<16x96xf32>, vector<48x96xf32> -> vector<48x96xf32>
    %cst_32 = arith.constant dense<0.000000e+00> : vector<48x96xf32>
    %32 = tpu.matmul %28, %17, %cst_32 {dimension_numbers = #tpu.dot_dimension_numbers<[1], [0], [0], [1], [0, 0, 1, 1], [], []>} : vector<48x3xf32>, vector<3x96xf32>, vector<48x96xf32> -> vector<48x96xf32>
    %33 = arith.mulf %32, %16 : vector<48x96xf32>
    %34 = arith.mulf %33, %31 : vector<48x96xf32>
    %cst_33 = arith.constant dense<0.000000e+00> : vector<16x96xf32>
    %35 = tpu.matmul %5, %34, %cst_33 {dimension_numbers = #tpu.dot_dimension_numbers<[1], [0], [0], [1], [0, 0, 1, 1], [], []>} : vector<16x48xf32>, vector<48x96xf32>, vector<16x96xf32> -> vector<16x96xf32>
    %cst_34 = arith.constant 0.000000e+00 : f32
    %36 = vector.broadcast %cst_34 : f32 to vector<16x3xf32>
    %37 = arith.cmpf ogt, %29, %36 : vector<16x3xf32>
    %cst_35 = arith.constant 1.000000e+00 : f32
    %38 = vector.broadcast %cst_35 : f32 to vector<16x3xf32>
    %39 = arith.select %37, %29, %38 : vector<16x3xi1>, vector<16x3xf32>
    %40 = tpu.reciprocal %39 {approx = true} : vector<16x3xf32> -> vector<16x3xf32>
    %cst_36 = arith.constant dense<0.000000e+00> : vector<16x96xf32>
    %41 = tpu.matmul %40, %17, %cst_36 {dimension_numbers = #tpu.dot_dimension_numbers<[1], [0], [0], [1], [0, 0, 1, 1], [], []>} : vector<16x3xf32>, vector<3x96xf32>, vector<16x96xf32> -> vector<16x96xf32>
    %42 = arith.mulf %35, %41 : vector<16x96xf32>
    %c1_i32 = arith.constant 1 : i32
    %43 = arith.cmpi eq, %arg0, %c1_i32 : i32
    %44 = arith.extui %43 : i1 to i32
    %c0_i32_37 = arith.constant 0 : i32
    %45 = arith.cmpi ne, %44, %c0_i32_37 : i32
    scf.if %45 {
      %c0_40 = arith.constant 0 : index
      %c0_41 = arith.constant 0 : index
      %49 = vector.load %arg11[%c0_40, %c0_41] : memref<16x96xf32, #tpu.memory_space<vmem>>, vector<16x96xf32>
      tpu.vector_store %arg11[%c0_40, %c0_41], %42 {strides = array<i32>} : memref<16x96xf32, #tpu.memory_space<vmem>>, vector<16x96xf32>,
    } else {
    }
    %c1_i32_38 = arith.constant 1 : i32
    %46 = arith.cmpi slt, %arg0, %c1_i32_38 : i32
    %47 = arith.extui %46 : i1 to i32
    %c0_i32_39 = arith.constant 0 : i32
    %48 = arith.cmpi ne, %47, %c0_i32_39 : i32
    scf.if %48 {
      %cst_40 = arith.constant 0.000000e+00 : f32
      %49 = vector.broadcast %cst_40 : f32 to vector<16x96xf32>
      %50 = arith.maximumf %42, %49 : vector<16x96xf32>
      %51 = arith.addf %3, %50 : vector<16x96xf32>
      %c0_41 = arith.constant 0 : index
      %c0_42 = arith.constant 0 : index
      %52 = vector.load %arg12[%c0_41, %c0_42] : memref<16x96xf32, #tpu.memory_space<vmem>>, vector<16x96xf32>
      tpu.vector_store %arg12[%c0_41, %c0_42], %51 {strides = array<i32>} : memref<16x96xf32, #tpu.memory_space<vmem>>, vector<16x96xf32>,
    } else {
    }
    return
  }
  func.func @transform_1(%arg0: i32) -> (i32, i32, i32) {
    %c0_i32 = arith.constant 0 : i32
    %c0_i32_0 = arith.constant 0 : i32
    %c0_i32_1 = arith.constant 0 : i32
    return %arg0, %c0_i32, %c0_i32_0 : i32, i32, i32
  }
  func.func @transform_2(%arg0: i32) -> (i32, i32, i32) {
    %c0_i32 = arith.constant 0 : i32
    %c0_i32_0 = arith.constant 0 : i32
    %c0_i32_1 = arith.constant 0 : i32
    return %arg0, %c0_i32, %c0_i32_0 : i32, i32, i32
  }
  func.func @transform_3(%arg0: i32) -> (i32, i32, i32) {
    %c0_i32 = arith.constant 0 : i32
    %c0_i32_0 = arith.constant 0 : i32
    %c0_i32_1 = arith.constant 0 : i32
    return %arg0, %c0_i32, %c0_i32_0 : i32, i32, i32
  }
  func.func @transform_4(%arg0: i32) -> (i32, i32, i32) {
    %c0_i32 = arith.constant 0 : i32
    %c0_i32_0 = arith.constant 0 : i32
    %c0_i32_1 = arith.constant 0 : i32
    return %arg0, %c0_i32, %c0_i32_0 : i32, i32, i32
  }
  func.func @transform_5(%arg0: i32) -> (i32, i32, i32) {
    %c0_i32 = arith.constant 0 : i32
    %c0_i32_0 = arith.constant 0 : i32
    %c0_i32_1 = arith.constant 0 : i32
    return %arg0, %c0_i32, %c0_i32_0 : i32, i32, i32
  }
  func.func @transform_6(%arg0: i32) -> (i32, i32) {
    %c0_i32 = arith.constant 0 : i32
    %c0_i32_0 = arith.constant 0 : i32
    %c0_i32_1 = arith.constant 0 : i32
    return %c0_i32, %c0_i32_0 : i32, i32
  }
  func.func @transform_10(%arg0: i32) -> (i32, i32) {
    %c0_i32 = arith.constant 0 : i32
    %c0_i32_0 = arith.constant 0 : i32
    %c0_i32_1 = arith.constant 0 : i32
    return %c0_i32, %c0_i32_0 : i32, i32
  }
}

</mosaic_0001>

<llo_original>
// kernel: tpu_custom_call.1
$region0: #{tpu_custom_call.1}
  #allocation0 [shape = 'u32[]', space=smem, size = 0x4, offset = 0x4, fixed_abs, tag = 'smem constant byte address 0x4 - core index']
  #allocation1 [shape = 'u32[72,128]{1,0:T(1,128)}', space=vmem, size = 0x9000, scoped, tag = 'internal scratch']
  #allocation2 [shape = 'f32[16,96]{1,0:T(8,128)}', space=vmem, size = 0x2000, scoped, tag = 'scratch operand']
  #allocation3 [shape = 'f32[48,16]{1,0:T(8,128)}', space=vmem, size = 0x6000, scoped, tag = 'scratch operand']
  #allocation4 [shape = 'f32[16,48]{1,0:T(8,128)}', space=vmem, size = 0x2000, scoped, tag = 'scratch operand']
  #allocation5 [shape = 'f32[48,16]{1,0:T(8,128)}', space=vmem, size = 0x6000, scoped, tag = 'scratch operand']
  #allocation9 [shape = 's32[]', space=sflag, size = 0x4, offset = 0, fixed_abs, tag = 'sflag constant byte address 0x0 - dummy sync flag']
  #allocation11 [shape = 's32[]', space=sflag, size = 0x4, offset = 0, fixed_abs, tag = 'sflag constant byte address 0x0 - dummy sync flag']
  #allocation13 [shape = 's32[]', space=sflag, size = 0x4, offset = 0, fixed_abs, tag = 'sflag constant byte address 0x0 - dummy sync flag']
  #allocation15 [shape = 's32[]', space=sflag, size = 0x4, offset = 0, fixed_abs, tag = 'sflag constant byte address 0x0 - dummy sync flag']
  %s0 = inlined_call_operand.vmem [shape: f32[16,96], index: 0, kind: input, shape index: {}]
  %s1 = inlined_call_operand.vmem [shape: f32[2,48,3], index: 1, kind: input, shape index: {}]
  %s2 = inlined_call_operand.vmem [shape: f32[2,48,96], index: 2, kind: input, shape index: {}]
  %s3 = inlined_call_operand.vmem [shape: f32[2,96,3], index: 3, kind: input, shape index: {}]
  %s4 = inlined_call_operand.vmem [shape: f32[2,96,3], index: 4, kind: input, shape index: {}]
  %s5 = inlined_call_operand.vmem [shape: f32[2,96,96], index: 5, kind: input, shape index: {}]
  %s6 = inlined_call_operand.vmem [shape: f32[3,96], index: 6, kind: input, shape index: {}]
  %s7 = inlined_call_operand.vmem [shape: f32[48,16], index: 7, kind: input, shape index: {}]
  %s8 = inlined_call_operand.vmem [shape: f32[16,48], index: 8, kind: input, shape index: {}]
  %s9 = inlined_call_operand.vmem [shape: f32[48,16], index: 9, kind: input, shape index: {}]
  %s10 = inlined_call_operand.hbm [shape: f32[16,96], index: 10, kind: output, shape index: {}]
  %s11 = sld [smem:[#allocation0]]
  $region149: #{tpu_custom_call.1} parent=0
    _
  %s13 = ssub.s32 1, %s11
  %s14 = scalar_select 0, %s13, %s11
  $region1: #{tpu_custom_call.1} parent=0
    #allocation6 [shape = 'u8[8192]{0}', space=vmem, size = 0x2000, scoped, tag = 'output window, operand 0, single buffered']
    #allocation7 [shape = 's32[2]{0}', space=sflag, size = 0x8, scoped, tag = 'scoped memory for tpu_custom_call.1']
    %15 = vsyncpa [#allocation7], 0
    loop: start=0, step=1, limit=4
    $region2: #{tpu_custom_call.1} parent=1 // loop_pre_header
      _
    $region3: #{tpu_custom_call.1} parent=1 // loop_header
      %s17 = sphi 0, %s21
      %p18 = scmp.ge.s32.totalorder %s17, 4
      %s27 = sphi 0, %s29
      %s30 = sphi 0, %s27
      %s31 = sphi 0, %s30
      %s47 = sphi 0, %s31
      %s53 = sphi 0, %s55
      %s56 = sphi 0, %s53
      %s57 = sphi 0, %s56
      %s73 = sphi 0, %s57
      %s79 = sphi 0, %s81
      %s82 = sphi 0, %s79
      %s83 = sphi 0, %s82
      %s99 = sphi 0, %s83
      %s105 = sphi 0, %s107
      %s108 = sphi 0, %s105
      %s109 = sphi 0, %s108
      %s125 = sphi 0, %s109
      %s131 = sphi 0, %s133
      %s134 = sphi 0, %s131
      %s135 = sphi 0, %s134
      %s151 = sphi 0, %s135
      %s155 = sphi 0, %s155
      %s157 = sphi 0, %s155
      %s158 = sphi 0, %s157
      %s172 = sphi 0, %s158
      %s176 = sphi 0, %s176
      %s178 = sphi 0, %s176
      %s179 = sphi 0, %s178
      %s193 = sphi 0, %s179
    $region4: #{tpu_custom_call.1} parent=1 // loop_header_branch
      %20 = sbr.rel (%p18) target = $region8
    $region5: #{tpu_custom_call.1} parent=1 // loop_body
      %s22 = ssub.s32 %s17, 1
      %s23 = ssub.s32 %s17, 2
      %s24 = sadd.s32 %s17, 1
      %s25 = ssub.s32 %s17, %s24
      %p26 = scmp.eq.s32.totalorder %s25, 0
      %s28 = sadd.s32 %s27, 1
      %s29 = scalar_select %p26, %s27, %s28
      %p32 = pneg %p26
      %p33 = scmp.eq.s32.totalorder %s17, 1
      %p34 = por %p32, %p33
      %p35 = scmp.ne.s32.totalorder %s27, %s30
      %p36 = scmp.eq.s32.totalorder %s17, 0
      %p37 = por %p35, %p36
      %p38 = scmp.ne.s32.totalorder %s27, %s30
      %p39 = scmp.eq.s32.totalorder %s22, 1
      %p40 = por %p38, %p39
      %p41 = scmp.ne.s32.totalorder %s30, %s31
      %p42 = scmp.eq.s32.totalorder %s22, 0
      %p43 = por %p41, %p42
      %p44 = scmp.ne.s32.totalorder %s30, %s31
      %p45 = scmp.eq.s32.totalorder %s23, 1
      %p46 = por %p44, %p45
      %p48 = scmp.ne.s32.totalorder %s31, %s47
      %p49 = scmp.eq.s32.totalorder %s23, 0
      %p50 = por %p48, %p49
      %s51 = ssub.s32 %s17, %s24
      %p52 = scmp.eq.s32.totalorder %s51, 0
      %s54 = sadd.s32 %s53, 1
      %s55 = scalar_select %p52, %s53, %s54
      %p58 = pneg %p52
      %p59 = scmp.eq.s32.totalorder %s17, 1
      %p60 = por %p58, %p59
      %p61 = scmp.ne.s32.totalorder %s53, %s56
      %p62 = scmp.eq.s32.totalorder %s17, 0
      %p63 = por %p61, %p62
      %p64 = scmp.ne.s32.totalorder %s53, %s56
      %p65 = scmp.eq.s32.totalorder %s22, 1
      %p66 = por %p64, %p65
      %p67 = scmp.ne.s32.totalorder %s56, %s57
      %p68 = scmp.eq.s32.totalorder %s22, 0
      %p69 = por %p67, %p68
      %p70 = scmp.ne.s32.totalorder %s56, %s57
      %p71 = scmp.eq.s32.totalorder %s23, 1
      %p72 = por %p70, %p71
      %p74 = scmp.ne.s32.totalorder %s57, %s73
      %p75 = scmp.eq.s32.totalorder %s23, 0
      %p76 = por %p74, %p75
      %s77 = ssub.s32 %s17, %s24
      %p78 = scmp.eq.s32.totalorder %s77, 0
      %s80 = sadd.s32 %s79, 1
      %s81 = scalar_select %p78, %s79, %s80
      %p84 = pneg %p78
      %p85 = scmp.eq.s32.totalorder %s17, 1
      %p86 = por %p84, %p85
      %p87 = scmp.ne.s32.totalorder %s79, %s82
      %p88 = scmp.eq.s32.totalorder %s17, 0
      %p89 = por %p87, %p88
      %p90 = scmp.ne.s32.totalorder %s79, %s82
      %p91 = scmp.eq.s32.totalorder %s22, 1
      %p92 = por %p90, %p91
      %p93 = scmp.ne.s32.totalorder %s82, %s83
      %p94 = scmp.eq.s32.totalorder %s22, 0
      %p95 = por %p93, %p94
      %p96 = scmp.ne.s32.totalorder %s82, %s83
      %p97 = scmp.eq.s32.totalorder %s23, 1
      %p98 = por %p96, %p97
      %p100 = scmp.ne.s32.totalorder %s83, %s99
      %p101 = scmp.eq.s32.totalorder %s23, 0
      %p102 = por %p100, %p101
      %s103 = ssub.s32 %s17, %s24
      %p104 = scmp.eq.s32.totalorder %s103, 0
      %s106 = sadd.s32 %s105, 1
      %s107 = scalar_select %p104, %s105, %s106
      %p110 = pneg %p104
      %p111 = scmp.eq.s32.totalorder %s17, 1
      %p112 = por %p110, %p111
      %p113 = scmp.ne.s32.totalorder %s105, %s108
      %p114 = scmp.eq.s32.totalorder %s17, 0
      %p115 = por %p113, %p114
      %p116 = scmp.ne.s32.totalorder %s105, %s108
      %p117 = scmp.eq.s32.totalorder %s22, 1
      %p118 = por %p116, %p117
      %p119 = scmp.ne.s32.totalorder %s108, %s109
      %p120 = scmp.eq.s32.totalorder %s22, 0
      %p121 = por %p119, %p120
      %p122 = scmp.ne.s32.totalorder %s108, %s109
      %p123 = scmp.eq.s32.totalorder %s23, 1
      %p124 = por %p122, %p123
      %p126 = scmp.ne.s32.totalorder %s109, %s125
      %p127 = scmp.eq.s32.totalorder %s23, 0
      %p128 = por %p126, %p127
      %s129 = ssub.s32 %s17, %s24
      %p130 = scmp.eq.s32.totalorder %s129, 0
      %s132 = sadd.s32 %s131, 1
      %s133 = scalar_select %p130, %s131, %s132
      %p136 = pneg %p130
      %p137 = scmp.eq.s32.totalorder %s17, 1
      %p138 = por %p136, %p137
      %p139 = scmp.ne.s32.totalorder %s131, %s134
      %p140 = scmp.eq.s32.totalorder %s17, 0
      %p141 = por %p139, %p140
      %p142 = scmp.ne.s32.totalorder %s131, %s134
      %p143 = scmp.eq.s32.totalorder %s22, 1
      %p144 = por %p142, %p143
      %p145 = scmp.ne.s32.totalorder %s134, %s135
      %p146 = scmp.eq.s32.totalorder %s22, 0
      %p147 = por %p145, %p146
      %p148 = scmp.ne.s32.totalorder %s134, %s135
      %p149 = scmp.eq.s32.totalorder %s23, 1
      %p150 = por %p148, %p149
      %p152 = scmp.ne.s32.totalorder %s135, %s151
      %p153 = scmp.eq.s32.totalorder %s23, 0
      %p154 = por %p152, %p153
      %s156 = sadd.s32 %s155, 1
      %p159 = scmp.eq.s32.totalorder %s17, 1
      %p160 = scmp.ne.s32.totalorder %s155, %s157
      %p161 = scmp.eq.s32.totalorder %s17, 0
      %p162 = por %p160, %p161
      %p163 = scmp.ne.s32.totalorder %s155, %s157
      %p164 = scmp.eq.s32.totalorder %s22, 1
      %p165 = por %p163, %p164
      %p166 = scmp.ne.s32.totalorder %s157, %s158
      %p167 = scmp.eq.s32.totalorder %s22, 0
      %p168 = por %p166, %p167
      %p169 = scmp.ne.s32.totalorder %s157, %s158
      %p170 = scmp.eq.s32.totalorder %s23, 1
      %p171 = por %p169, %p170
      %p173 = scmp.ne.s32.totalorder %s158, %s172
      %p174 = scmp.eq.s32.totalorder %s23, 0
      %p175 = por %p173, %p174
      %s177 = sadd.s32 %s176, 1
      %p180 = scmp.eq.s32.totalorder %s17, 1
      %p181 = scmp.ne.s32.totalorder %s176, %s178
      %p182 = scmp.eq.s32.totalorder %s17, 0
      %p183 = por %p181, %p182
      %p184 = scmp.ne.s32.totalorder %s176, %s178
      %p185 = scmp.eq.s32.totalorder %s22, 1
      %p186 = por %p184, %p185
      %p187 = scmp.ne.s32.totalorder %s178, %s179
      %p188 = scmp.eq.s32.totalorder %s22, 0
      %p189 = por %p187, %p188
      %p190 = scmp.ne.s32.totalorder %s178, %s179
      %p191 = scmp.eq.s32.totalorder %s23, 1
      %p192 = por %p190, %p191
      %p194 = scmp.ne.s32.totalorder %s179, %s193
      %p195 = scmp.eq.s32.totalorder %s23, 0
      %p196 = por %p194, %p195
      %p197 = scmp.le.s32.totalorder 1, %s17
      %p198 = scmp.lt.s32.totalorder %s17, 3
      %p199 = pnand %p197, %p198
      %p200 = pneg %p199
      // Predicated region
      $region9: #{tpu_custom_call.1} parent=5 // pred_check
        _
      $region10: #{tpu_custom_call.1} parent=5 // pred_check_branch
        %202 = sbr.rel (%p199) target = $region12
      $region11: #{tpu_custom_call.1} parent=5 // pred_region
        %s203 = ssub.s32 %s17, 1
        // Predicated region
        $region13: #{tpu_custom_call.1} parent=11 // pred_check
          %p204 = pneg %p168
        $region14: #{tpu_custom_call.1} parent=11 // pred_check_branch
          %206 = sbr.rel (%p204) target = $region16
        $region15: #{tpu_custom_call.1} parent=11 // pred_region
          _
        $region16: #{tpu_custom_call.1} parent=11 // pred_fallthru
          _
      $region12: #{tpu_custom_call.1} parent=5 // pred_fallthru
        _
      %p207 = scmp.lt.s32.totalorder %s17, 2
      // Predicated region
      $region17: #{tpu_custom_call.1} parent=5 // pred_check
        %p208 = pneg %p207
      $region18: #{tpu_custom_call.1} parent=5 // pred_check_branch
        %210 = sbr.rel (%p208) target = $region20
      $region19: #{tpu_custom_call.1} parent=5 // pred_region
        // Predicated region
        $region21: #{tpu_custom_call.1} parent=19 // pred_check
          %p211 = pneg %p37
        $region22: #{tpu_custom_call.1} parent=19 // pred_check_branch
          %213 = sbr.rel (%p211) target = $region24
        $region23: #{tpu_custom_call.1} parent=19 // pred_region
          %p214 = scmp.lt.s32.totalorder %s17, 1
          %s215 = scalar_select %p214, %s17, 1
          %s216 = smul.addr %s215, 6
          %s217 = smul.addr %s216, 8
          %s218 = scalar_lea.vmem %s1, %s217
        $region24: #{tpu_custom_call.1} parent=19 // pred_fallthru
          _
        // Predicated region
        $region25: #{tpu_custom_call.1} parent=19 // pred_check
          %p219 = pneg %p63
        $region26: #{tpu_custom_call.1} parent=19 // pred_check_branch
          %221 = sbr.rel (%p219) target = $region28
        $region27: #{tpu_custom_call.1} parent=19 // pred_region
          %p222 = scmp.lt.s32.totalorder %s17, 1
          %s223 = scalar_select %p222, %s17, 1
          %s224 = smul.addr %s223, 6
          %s225 = smul.addr %s224, 8
          %s226 = scalar_lea.vmem %s2, %s225
        $region28: #{tpu_custom_call.1} parent=19 // pred_fallthru
          _
        // Predicated region
        $region29: #{tpu_custom_call.1} parent=19 // pred_check
          %p227 = pneg %p89
        $region30: #{tpu_custom_call.1} parent=19 // pred_check_branch
          %229 = sbr.rel (%p227) target = $region32
        $region31: #{tpu_custom_call.1} parent=19 // pred_region
          %p230 = scmp.lt.s32.totalorder %s17, 1
          %s231 = scalar_select %p230, %s17, 1
          %s232 = smul.addr %s231, 12
          %s233 = smul.addr %s232, 8
          %s234 = scalar_lea.vmem %s3, %s233
        $region32: #{tpu_custom_call.1} parent=19 // pred_fallthru
          _
        // Predicated region
        $region33: #{tpu_custom_call.1} parent=19 // pred_check
          %p235 = pneg %p115
        $region34: #{tpu_custom_call.1} parent=19 // pred_check_branch
          %237 = sbr.rel (%p235) target = $region36
        $region35: #{tpu_custom_call.1} parent=19 // pred_region
          %p238 = scmp.lt.s32.totalorder %s17, 1
          %s239 = scalar_select %p238, %s17, 1
          %s240 = smul.addr %s239, 12
          %s241 = smul.addr %s240, 8
          %s242 = scalar_lea.vmem %s4, %s241
        $region36: #{tpu_custom_call.1} parent=19 // pred_fallthru
          _
        // Predicated region
        $region37: #{tpu_custom_call.1} parent=19 // pred_check
          %p243 = pneg %p141
        $region38: #{tpu_custom_call.1} parent=19 // pred_check_branch
          %245 = sbr.rel (%p243) target = $region40
        $region39: #{tpu_custom_call.1} parent=19 // pred_region
          %p246 = scmp.lt.s32.totalorder %s17, 1
          %s247 = scalar_select %p246, %s17, 1
          %s248 = smul.addr %s247, 12
          %s249 = smul.addr %s248, 8
          %s250 = scalar_lea.vmem %s5, %s249
        $region40: #{tpu_custom_call.1} parent=19 // pred_fallthru
          _
      $region20: #{tpu_custom_call.1} parent=5 // pred_fallthru
        _
      %p251 = scmp.le.s32.totalorder 1, %s17
      %p252 = scmp.lt.s32.totalorder %s17, 3
      %p253 = pnand %p251, %p252
      %p254 = pneg %p253
      // Predicated region
      $region41: #{tpu_custom_call.1} parent=5 // pred_check
        _
      $region42: #{tpu_custom_call.1} parent=5 // pred_check_branch
        %256 = sbr.rel (%p253) target = $region44
      $region43: #{tpu_custom_call.1} parent=5 // pred_region
        %s257 = ssub.s32 %s17, 1
        %p258 = scmp.lt.s32.totalorder %s22, 1
        %s259 = scalar_select %p258, %s22, 1
        %s260 = smul.addr %s259, 6
        %s261 = smul.addr %s260, 8
        %s262 = scalar_lea.vmem %s1, %s261
        %p263 = pneg %p43
        %p264 = pneg %p40
        %p265 = scmp.lt.s32.totalorder %s22, 1
        %s266 = scalar_select %p265, %s22, 1
        %s267 = smul.addr %s266, 6
        %s268 = smul.addr %s267, 8
        %s269 = scalar_lea.vmem %s2, %s268
        %p270 = pneg %p69
        %p271 = pneg %p66
        %p272 = scmp.lt.s32.totalorder %s22, 1
        %s273 = scalar_select %p272, %s22, 1
        %s274 = smul.addr %s273, 12
        %s275 = smul.addr %s274, 8
        %s276 = scalar_lea.vmem %s3, %s275
        %p277 = pneg %p95
        %p278 = pneg %p92
        %p279 = scmp.lt.s32.totalorder %s22, 1
        %s280 = scalar_select %p279, %s22, 1
        %s281 = smul.addr %s280, 12
        %s282 = smul.addr %s281, 8
        %s283 = scalar_lea.vmem %s4, %s282
        %p284 = pneg %p121
        %p285 = pneg %p118
        %p286 = scmp.lt.s32.totalorder %s22, 1
        %s287 = scalar_select %p286, %s22, 1
        %s288 = smul.addr %s287, 12
        %s289 = smul.addr %s288, 8
        %s290 = scalar_lea.vmem %s5, %s289
        %p291 = pneg %p147
        %p292 = pneg %p144
        %p293 = pneg %p168
        %p294 = pneg %p165
        %p295 = pneg %p189
        %p296 = pneg %p186
        %p297 = scmp.lt.s32.totalorder %s22, 1
        %s298 = scalar_select %p297, %s22, 1
        %s299 = smul.addr %s298, 6
        %s300 = smul.addr %s299, 8
        %s301 = scalar_lea.vmem %s1, %s300
        %p302 = scmp.lt.s32.totalorder %s22, 1
        %s303 = scalar_select %p302, %s22, 1
        %s304 = smul.addr %s303, 6
        %s305 = smul.addr %s304, 8
        %s306 = scalar_lea.vmem %s2, %s305
        %p307 = scmp.lt.s32.totalorder %s22, 1
        %s308 = scalar_select %p307, %s22, 1
        %s309 = smul.addr %s308, 12
        %s310 = smul.addr %s309, 8
        %s311 = scalar_lea.vmem %s3, %s310
        %p312 = scmp.lt.s32.totalorder %s22, 1
        %s313 = scalar_select %p312, %s22, 1
        %s314 = smul.addr %s313, 12
        %s315 = smul.addr %s314, 8
        %s316 = scalar_lea.vmem %s4, %s315
        %p317 = scmp.lt.s32.totalorder %s22, 1
        %s318 = scalar_select %p317, %s22, 1
        %s319 = smul.addr %s318, 12
        %s320 = smul.addr %s319, 8
        %s321 = scalar_lea.vmem %s5, %s320
        %p322 = scmp.eq.s32.totalorder %s22, 0
        // Predicated region
        $region45: #{tpu_custom_call.1} parent=43 // pred_check
          %p323 = pneg %p322
        $region46: #{tpu_custom_call.1} parent=43 // pred_check_branch
          %325 = sbr.rel (%p323) target = $region48
        $region47: #{tpu_custom_call.1} parent=43 // pred_region
          $region49: #{tpu_custom_call.1} parent=47
            #allocation8 [shape = 's32[1]{0}', space=sflag, size = 0x4, scoped, tag = 'scoped memory for tpu_custom_call.1']
            // Predicated region
            $region50: #{tpu_custom_call.1} parent=49 // pred_check
              _
            $region51: #{tpu_custom_call.1} parent=49 // pred_check_branch
              %327 = sbr.rel (0) target = $region53
            $region52: #{tpu_custom_call.1} parent=49 // pred_region
              loop: start=0, step=1, limit=1
              $region54: #{tpu_custom_call.1} parent=52 // loop_pre_header
                _
              $region55: #{tpu_custom_call.1} parent=52 // loop_header
                %s329 = sphi 0, %s333
                %p330 = scmp.ge.s32.totalorder %s329, 1
                %s334 = sphi %s0, %s0
                %s335 = sphi [#allocation2], [#allocation2]
              $region56: #{tpu_custom_call.1} parent=52 // loop_header_branch
                %332 = sbr.rel (%p330) target = $region60
              $region57: #{tpu_custom_call.1} parent=52 // loop_body
                %v336 = vld [vmem:[%s334] sm:$0xff]
                %337 = vst [vmem:[%s335] sm:$0xff] %v336
                %v338 = vld [vmem:[%s334 + $0x8] sm:$0xff]
                %339 = vst [vmem:[%s335 + $0x8] sm:$0xff] %v338
              $region58: #{tpu_custom_call.1} parent=52 // loop_footer
                %s333 = sadd.s32 1, %s329
              $region59: #{tpu_custom_call.1} parent=52 // loop_footer_branch
                %328 = sbr.rel target = $region55
              $region60: #{tpu_custom_call.1} parent=52 // loop_exit
                _
            $region53: #{tpu_custom_call.1} parent=49 // pred_fallthru
              _
            // Predicated region
            $region61: #{tpu_custom_call.1} parent=49 // pred_check
              _
            $region62: #{tpu_custom_call.1} parent=49 // pred_check_branch
              %341 = sbr.rel target = $region64
            $region63: #{tpu_custom_call.1} parent=49 // pred_region
              _
            $region64: #{tpu_custom_call.1} parent=49 // pred_fallthru
              _
            // Predicated region
            $region65: #{tpu_custom_call.1} parent=49 // pred_check
              _
            $region66: #{tpu_custom_call.1} parent=49 // pred_check_branch
              %344 = sbr.rel (0) target = $region68
            $region67: #{tpu_custom_call.1} parent=49 // pred_region
              %345 = vsyncadd [#allocation8], 256
            $region68: #{tpu_custom_call.1} parent=49 // pred_fallthru
              _
            %s346 = smul.u32 16, 1
            %s347 = sshll.u32 %s346, 4
            %348 = dma.done [#allocation8], %s347
          $region69: #{tpu_custom_call.1} parent=47
            #allocation10 [shape = 's32[1]{0}', space=sflag, size = 0x4, scoped, tag = 'scoped memory for tpu_custom_call.1']
            // Predicated region
            $region70: #{tpu_custom_call.1} parent=69 // pred_check
              _
            $region71: #{tpu_custom_call.1} parent=69 // pred_check_branch
              %350 = sbr.rel (0) target = $region73
            $region72: #{tpu_custom_call.1} parent=69 // pred_region
              loop: start=0, step=1, limit=1
              $region74: #{tpu_custom_call.1} parent=72 // loop_pre_header
                _
              $region75: #{tpu_custom_call.1} parent=72 // loop_header
                %s352 = sphi 0, %s356
                %p353 = scmp.ge.s32.totalorder %s352, 1
                %s357 = sphi %s7, %s7
                %s358 = sphi [#allocation3], [#allocation3]
              $region76: #{tpu_custom_call.1} parent=72 // loop_header_branch
                %355 = sbr.rel (%p353) target = $region80
              $region77: #{tpu_custom_call.1} parent=72 // loop_body
                %v359 = vld [vmem:[%s357] sm:$0xff]
                %360 = vst [vmem:[%s358] sm:$0xff] %v359
                %v361 = vld [vmem:[%s357 + $0x8] sm:$0xff]
                %362 = vst [vmem:[%s358 + $0x8] sm:$0xff] %v361
                %v363 = vld [vmem:[%s357 + $0x10] sm:$0xff]
                %364 = vst [vmem:[%s358 + $0x10] sm:$0xff] %v363
                %v365 = vld [vmem:[%s357 + $0x18] sm:$0xff]
                %366 = vst [vmem:[%s358 + $0x18] sm:$0xff] %v365
                %v367 = vld [vmem:[%s357 + $0x20] sm:$0xff]
                %368 = vst [vmem:[%s358 + $0x20] sm:$0xff] %v367
                %v369 = vld [vmem:[%s357 + $0x28] sm:$0xff]
                %370 = vst [vmem:[%s358 + $0x28] sm:$0xff] %v369
              $region78: #{tpu_custom_call.1} parent=72 // loop_footer
                %s356 = sadd.s32 1, %s352
              $region79: #{tpu_custom_call.1} parent=72 // loop_footer_branch
                %351 = sbr.rel target = $region75
              $region80: #{tpu_custom_call.1} parent=72 // loop_exit
                _
            $region73: #{tpu_custom_call.1} parent=69 // pred_fallthru
              _
            // Predicated region
            $region81: #{tpu_custom_call.1} parent=69 // pred_check
              _
            $region82: #{tpu_custom_call.1} parent=69 // pred_check_branch
              %372 = sbr.rel target = $region84
            $region83: #{tpu_custom_call.1} parent=69 // pred_region
              _
            $region84: #{tpu_custom_call.1} parent=69 // pred_fallthru
              _
            // Predicated region
            $region85: #{tpu_custom_call.1} parent=69 // pred_check
              _
            $region86: #{tpu_custom_call.1} parent=69 // pred_check_branch
              %375 = sbr.rel (0) target = $region88
            $region87: #{tpu_custom_call.1} parent=69 // pred_region
              %376 = vsyncadd [#allocation10], 768
            $region88: #{tpu_custom_call.1} parent=69 // pred_fallthru
              _
            %s377 = smul.u32 48, 1
            %s378 = sshll.u32 %s377, 4
            %379 = dma.done [#allocation10], %s378
          $region89: #{tpu_custom_call.1} parent=47
            #allocation12 [shape = 's32[1]{0}', space=sflag, size = 0x4, scoped, tag = 'scoped memory for tpu_custom_call.1']
            // Predicated region
            $region90: #{tpu_custom_call.1} parent=89 // pred_check
              _
            $region91: #{tpu_custom_call.1} parent=89 // pred_check_branch
              %381 = sbr.rel (0) target = $region93
            $region92: #{tpu_custom_call.1} parent=89 // pred_region
              loop: start=0, step=1, limit=1
              $region94: #{tpu_custom_call.1} parent=92 // loop_pre_header
                _
              $region95: #{tpu_custom_call.1} parent=92 // loop_header
                %s383 = sphi 0, %s387
                %p384 = scmp.ge.s32.totalorder %s383, 1
                %s388 = sphi %s8, %s8
                %s389 = sphi [#allocation4], [#allocation4]
              $region96: #{tpu_custom_call.1} parent=92 // loop_header_branch
                %386 = sbr.rel (%p384) target = $region100
              $region97: #{tpu_custom_call.1} parent=92 // loop_body
                %v390 = vld [vmem:[%s388] sm:$0xff]
                %391 = vst [vmem:[%s389] sm:$0xff] %v390
                %v392 = vld [vmem:[%s388 + $0x8] sm:$0xff]
                %393 = vst [vmem:[%s389 + $0x8] sm:$0xff] %v392
              $region98: #{tpu_custom_call.1} parent=92 // loop_footer
                %s387 = sadd.s32 1, %s383
              $region99: #{tpu_custom_call.1} parent=92 // loop_footer_branch
                %382 = sbr.rel target = $region95
              $region100: #{tpu_custom_call.1} parent=92 // loop_exit
                _
            $region93: #{tpu_custom_call.1} parent=89 // pred_fallthru
              _
            // Predicated region
            $region101: #{tpu_custom_call.1} parent=89 // pred_check
              _
            $region102: #{tpu_custom_call.1} parent=89 // pred_check_branch
              %395 = sbr.rel target = $region104
            $region103: #{tpu_custom_call.1} parent=89 // pred_region
              _
            $region104: #{tpu_custom_call.1} parent=89 // pred_fallthru
              _
            // Predicated region
            $region105: #{tpu_custom_call.1} parent=89 // pred_check
              _
            $region106: #{tpu_custom_call.1} parent=89 // pred_check_branch
              %398 = sbr.rel (0) target = $region108
            $region107: #{tpu_custom_call.1} parent=89 // pred_region
              %399 = vsyncadd [#allocation12], 256
            $region108: #{tpu_custom_call.1} parent=89 // pred_fallthru
              _
            %s400 = smul.u32 16, 1
            %s401 = sshll.u32 %s400, 4
            %402 = dma.done [#allocation12], %s401
          $region109: #{tpu_custom_call.1} parent=47
            #allocation14 [shape = 's32[1]{0}', space=sflag, size = 0x4, scoped, tag = 'scoped memory for tpu_custom_call.1']
            // Predicated region
            $region110: #{tpu_custom_call.1} parent=109 // pred_check
              _
            $region111: #{tpu_custom_call.1} parent=109 // pred_check_branch
              %404 = sbr.rel (0) target = $region113
            $region112: #{tpu_custom_call.1} parent=109 // pred_region
              loop: start=0, step=1, limit=1
              $region114: #{tpu_custom_call.1} parent=112 // loop_pre_header
                _
              $region115: #{tpu_custom_call.1} parent=112 // loop_header
                %s406 = sphi 0, %s410
                %p407 = scmp.ge.s32.totalorder %s406, 1
                %s411 = sphi %s9, %s9
                %s412 = sphi [#allocation5], [#allocation5]
              $region116: #{tpu_custom_call.1} parent=112 // loop_header_branch
                %409 = sbr.rel (%p407) target = $region120
              $region117: #{tpu_custom_call.1} parent=112 // loop_body
                %v413 = vld [vmem:[%s411] sm:$0xff]
                %414 = vst [vmem:[%s412] sm:$0xff] %v413
                %v415 = vld [vmem:[%s411 + $0x8] sm:$0xff]
                %416 = vst [vmem:[%s412 + $0x8] sm:$0xff] %v415
                %v417 = vld [vmem:[%s411 + $0x10] sm:$0xff]
                %418 = vst [vmem:[%s412 + $0x10] sm:$0xff] %v417
                %v419 = vld [vmem:[%s411 + $0x18] sm:$0xff]
                %420 = vst [vmem:[%s412 + $0x18] sm:$0xff] %v419
                %v421 = vld [vmem:[%s411 + $0x20] sm:$0xff]
                %422 = vst [vmem:[%s412 + $0x20] sm:$0xff] %v421
                %v423 = vld [vmem:[%s411 + $0x28] sm:$0xff]
                %424 = vst [vmem:[%s412 + $0x28] sm:$0xff] %v423
              $region118: #{tpu_custom_call.1} parent=112 // loop_footer
                %s410 = sadd.s32 1, %s406
              $region119: #{tpu_custom_call.1} parent=112 // loop_footer_branch
                %405 = sbr.rel target = $region115
              $region120: #{tpu_custom_call.1} parent=112 // loop_exit
                _
            $region113: #{tpu_custom_call.1} parent=109 // pred_fallthru
              _
            // Predicated region
            $region121: #{tpu_custom_call.1} parent=109 // pred_check
              _
            $region122: #{tpu_custom_call.1} parent=109 // pred_check_branch
              %426 = sbr.rel target = $region124
            $region123: #{tpu_custom_call.1} parent=109 // pred_region
              _
            $region124: #{tpu_custom_call.1} parent=109 // pred_fallthru
              _
            // Predicated region
            $region125: #{tpu_custom_call.1} parent=109 // pred_check
              _
            $region126: #{tpu_custom_call.1} parent=109 // pred_check_branch
              %429 = sbr.rel (0) target = $region128
            $region127: #{tpu_custom_call.1} parent=109 // pred_region
              %430 = vsyncadd [#allocation14], 768
            $region128: #{tpu_custom_call.1} parent=109 // pred_fallthru
              _
            %s431 = smul.u32 48, 1
            %s432 = sshll.u32 %s431, 4
            %433 = dma.done [#allocation14], %s432
        $region48: #{tpu_custom_call.1} parent=43 // pred_fallthru
          _
        %v434 = vld [vmem:[#allocation2] sm:$0xff]
        %v435 = vld [vmem:[#allocation2 + $0x8] sm:$0xff]
        %v436 = vld [vmem:[#allocation3] sm:$0xff]
        %v437 = vld [vmem:[#allocation3 + $0x8] sm:$0xff]
        %v438 = vld [vmem:[#allocation3 + $0x10] sm:$0xff]
        %v439 = vld [vmem:[#allocation3 + $0x18] sm:$0xff]
        %v440 = vld [vmem:[#allocation3 + $0x20] sm:$0xff]
        %v441 = vld [vmem:[#allocation3 + $0x28] sm:$0xff]
        %v442 = vld [vmem:[#allocation4] sm:$0xff]
        %v443 = vld [vmem:[#allocation4 + $0x8] sm:$0xff]
        %v444 = vld [vmem:[#allocation5] sm:$0xff]
        %v445 = vld [vmem:[#allocation5 + $0x8] sm:$0xff]
        %v446 = vld [vmem:[#allocation5 + $0x10] sm:$0xff]
        %v447 = vld [vmem:[#allocation5 + $0x18] sm:$0xff]
        %v448 = vld [vmem:[#allocation5 + $0x20] sm:$0xff]
        %v449 = vld [vmem:[#allocation5 + $0x28] sm:$0xff]
        %v450 = vld [vmem:[%s311] sm:$0xff]
        %v451 = vld [vmem:[%s311 + $0x8] sm:$0xff]
        %v452 = vld [vmem:[%s311 + $0x10] sm:$0xff]
        %v453 = vld [vmem:[%s311 + $0x18] sm:$0xff]
        %v454 = vld [vmem:[%s311 + $0x20] sm:$0xff]
        %v455 = vld [vmem:[%s311 + $0x28] sm:$0xff]
        %v456 = vld [vmem:[%s311 + $0x30] sm:$0xff]
        %v457 = vld [vmem:[%s311 + $0x38] sm:$0xff]
        %v458 = vld [vmem:[%s311 + $0x40] sm:$0xff]
        %v459 = vld [vmem:[%s311 + $0x48] sm:$0xff]
        %v460 = vld [vmem:[%s311 + $0x50] sm:$0xff]
        %v461 = vld [vmem:[%s311 + $0x58] sm:$0xff]
        %v462 = vld [vmem:[%s316] sm:$0xff]
        %v463 = vld [vmem:[%s316 + $0x8] sm:$0xff]
        %v464 = vld [vmem:[%s316 + $0x10] sm:$0xff]
        %v465 = vld [vmem:[%s316 + $0x18] sm:$0xff]
        %v466 = vld [vmem:[%s316 + $0x20] sm:$0xff]
        %v467 = vld [vmem:[%s316 + $0x28] sm:$0xff]
        %v468 = vld [vmem:[%s316 + $0x30] sm:$0xff]
        %v469 = vld [vmem:[%s316 + $0x38] sm:$0xff]
        %v470 = vld [vmem:[%s316 + $0x40] sm:$0xff]
        %v471 = vld [vmem:[%s316 + $0x48] sm:$0xff]
        %v472 = vld [vmem:[%s316 + $0x50] sm:$0xff]
        %v473 = vld [vmem:[%s316 + $0x58] sm:$0xff]
        %v474 = vld [vmem:[%s321] sm:$0xff]
        %v475 = vld [vmem:[%s321 + $0x8] sm:$0xff]
        %v476 = vld [vmem:[%s321 + $0x10] sm:$0xff]
        %v477 = vld [vmem:[%s321 + $0x18] sm:$0xff]
        %v478 = vld [vmem:[%s321 + $0x20] sm:$0xff]
        %v479 = vld [vmem:[%s321 + $0x28] sm:$0xff]
        %v480 = vld [vmem:[%s321 + $0x30] sm:$0xff]
        %v481 = vld [vmem:[%s321 + $0x38] sm:$0xff]
        %v482 = vld [vmem:[%s321 + $0x40] sm:$0xff]
        %v483 = vld [vmem:[%s321 + $0x48] sm:$0xff]
        %v484 = vld [vmem:[%s321 + $0x50] sm:$0xff]
        %v485 = vld [vmem:[%s321 + $0x58] sm:$0xff]
        %v486 = vld [vmem:[%s301] sm:$0xff]
        %v487 = vld [vmem:[%s301 + $0x8] sm:$0xff]
        %v488 = vld [vmem:[%s301 + $0x10] sm:$0xff]
        %v489 = vld [vmem:[%s301 + $0x18] sm:$0xff]
        %v490 = vld [vmem:[%s301 + $0x20] sm:$0xff]
        %v491 = vld [vmem:[%s301 + $0x28] sm:$0xff]
        %v492 = vld [vmem:[%s306] sm:$0xff]
        %v493 = vld [vmem:[%s306 + $0x8] sm:$0xff]
        %v494 = vld [vmem:[%s306 + $0x10] sm:$0xff]
        %v495 = vld [vmem:[%s306 + $0x18] sm:$0xff]
        %v496 = vld [vmem:[%s306 + $0x20] sm:$0xff]
        %v497 = vld [vmem:[%s306 + $0x28] sm:$0xff]
        %v498 = vld [vmem:[%s6] sm:$0x7]
        %vm499 = vcmask 785408
        %v501 = vsel %vm499, %v434, 0
        %v504 = vsel %vm499, %v435, 0
        %506 = vmatpush.msra.mxu0 0.0
        %507 = vmatpush.msra.mxu0 0.0
        %508 = vmatpush.msra.mxu0 0.0
        %509 = vmatpush.msra.mxu0 0.0
        %510 = vmatpush.msra.mxu0 %v461
        %511 = vmatpush.msra.mxu0 %v460
        %512 = vmatpush.msra.mxu0 %v459
        %513 = vmatpush.msra.mxu0 %v458
        %514 = vmatpush.msra.mxu0 %v457
        %515 = vmatpush.msra.mxu0 %v456
        %516 = vmatpush.msra.mxu0 %v455
        %517 = vmatpush.msra.mxu0 %v454
        %518 = vmatpush.msra.mxu0 %v453
        %519 = vmatpush.msra.mxu0 %v452
        %520 = vmatpush.msra.mxu0 %v451
        %521 = vmatpush.msra.mxu0 %v450
        %522 = vmatmul.f32.gmra.mxu0 %v501
        %v523 = vpop.f32.mrf.mxu0
        %v524 = vadd.f32 0.0, %v523
        %525 = vmatmul.f32.gmra.mxu0 %v504
        %v526 = vpop.f32.mrf.mxu0
        %v527 = vadd.f32 0.0, %v526
        %528 = vdwg.mxu0
        %529 = vmatpush.msra.mxu0 0.0
        %530 = vmatpush.msra.mxu0 0.0
        %531 = vmatpush.msra.mxu0 0.0
        %532 = vmatpush.msra.mxu0 0.0
        %533 = vmatpush.msra.mxu0 %v473
        %534 = vmatpush.msra.mxu0 %v472
        %535 = vmatpush.msra.mxu0 %v471
        %536 = vmatpush.msra.mxu0 %v470
        %537 = vmatpush.msra.mxu0 %v469
        %538 = vmatpush.msra.mxu0 %v468
        %539 = vmatpush.msra.mxu0 %v467
        %540 = vmatpush.msra.mxu0 %v466
        %541 = vmatpush.msra.mxu0 %v465
        %542 = vmatpush.msra.mxu0 %v464
        %543 = vmatpush.msra.mxu0 %v463
        %544 = vmatpush.msra.mxu0 %v462
        %545 = vmatmul.f32.gmra.mxu0 %v501
        %v546 = vpop.f32.mrf.mxu0
        %v547 = vadd.f32 0.0, %v546
        %548 = vmatmul.f32.gmra.mxu0 %v504
        %v549 = vpop.f32.mrf.mxu0
        %v550 = vadd.f32 0.0, %v549
        %551 = vdwg.mxu0
        %vm552 = vcmask 130048
        %v554 = vsel %vm552, %v436, 0
        %v557 = vsel %vm552, %v437, 0
        %v560 = vsel %vm552, %v438, 0
        %v563 = vsel %vm552, %v439, 0
        %v566 = vsel %vm552, %v440, 0
        %v569 = vsel %vm552, %v441, 0
        %571 = vmatpush.msra.mxu0 0.0
        %572 = vmatpush.msra.mxu0 0.0
        %573 = vmatpush.msra.mxu0 0.0
        %574 = vmatpush.msra.mxu0 0.0
        %575 = vmatpush.msra.mxu0 0.0
        %576 = vmatpush.msra.mxu0 0.0
        %577 = vmatpush.msra.mxu0 0.0
        %578 = vmatpush.msra.mxu0 0.0
        %579 = vmatpush.msra.mxu0 0.0
        %580 = vmatpush.msra.mxu0 0.0
        %581 = vmatpush.msra.mxu0 0.0
        %582 = vmatpush.msra.mxu0 0.0
        %583 = vmatpush.msra.mxu0 0.0
        %584 = vmatpush.msra.mxu0 0.0
        %585 = vmatpush.msra.mxu0 %v527
        %586 = vmatpush.msra.mxu0 %v524
        %587 = vmatmul.f32.gmra.mxu0 %v554
        %v588 = vpop.f32.mrf.mxu0
        %v589 = vadd.f32 0.0, %v588
        %590 = vmatmul.f32.gmra.mxu0 %v557
        %v591 = vpop.f32.mrf.mxu0
        %v592 = vadd.f32 0.0, %v591
        %593 = vmatmul.f32.gmra.mxu0 %v560
        %v594 = vpop.f32.mrf.mxu0
        %v595 = vadd.f32 0.0, %v594
        %596 = vmatmul.f32.gmra.mxu0 %v563
        %v597 = vpop.f32.mrf.mxu0
        %v598 = vadd.f32 0.0, %v597
        %599 = vmatmul.f32.gmra.mxu0 %v566
        %v600 = vpop.f32.mrf.mxu0
        %v601 = vadd.f32 0.0, %v600
        %602 = vmatmul.f32.gmra.mxu0 %v569
        %v603 = vpop.f32.mrf.mxu0
        %v604 = vadd.f32 0.0, %v603
        %605 = vdwg.mxu0
        %v606 = vadd.f32 %v486, %v589
        %v607 = vadd.f32 %v487, %v592
        %v608 = vadd.f32 %v488, %v595
        %v609 = vadd.f32 %v489, %v598
        %v610 = vadd.f32 %v490, %v601
        %v611 = vadd.f32 %v491, %v604
        %v613 = vsel %vm552, %v444, 0
        %v616 = vsel %vm552, %v445, 0
        %v619 = vsel %vm552, %v446, 0
        %v622 = vsel %vm552, %v447, 0
        %v625 = vsel %vm552, %v448, 0
        %v628 = vsel %vm552, %v449, 0
        %630 = vmatpush.msra.mxu0 0.0
        %631 = vmatpush.msra.mxu0 0.0
        %632 = vmatpush.msra.mxu0 0.0
        %633 = vmatpush.msra.mxu0 0.0
        %634 = vmatpush.msra.mxu0 0.0
        %635 = vmatpush.msra.mxu0 0.0
        %636 = vmatpush.msra.mxu0 0.0
        %637 = vmatpush.msra.mxu0 0.0
        %638 = vmatpush.msra.mxu0 0.0
        %639 = vmatpush.msra.mxu0 0.0
        %640 = vmatpush.msra.mxu0 0.0
        %641 = vmatpush.msra.mxu0 0.0
        %642 = vmatpush.msra.mxu0 0.0
        %643 = vmatpush.msra.mxu0 0.0
        %644 = vmatpush.msra.mxu0 %v550
        %645 = vmatpush.msra.mxu0 %v547
        %646 = vmatmul.f32.gmra.mxu0 %v613
        %v647 = vpop.f32.mrf.mxu0
        %v648 = vadd.f32 0.0, %v647
        %649 = vmatmul.f32.gmra.mxu0 %v616
        %v650 = vpop.f32.mrf.mxu0
        %v651 = vadd.f32 0.0, %v650
        %652 = vmatmul.f32.gmra.mxu0 %v619
        %v653 = vpop.f32.mrf.mxu0
        %v654 = vadd.f32 0.0, %v653
        %655 = vmatmul.f32.gmra.mxu0 %v622
        %v656 = vpop.f32.mrf.mxu0
        %v657 = vadd.f32 0.0, %v656
        %658 = vmatmul.f32.gmra.mxu0 %v625
        %v659 = vpop.f32.mrf.mxu0
        %v660 = vadd.f32 0.0, %v659
        %661 = vmatmul.f32.gmra.mxu0 %v628
        %v662 = vpop.f32.mrf.mxu0
        %v663 = vadd.f32 0.0, %v662
        %664 = vdwg.mxu0
        %v665 = vadd.f32 %v606, %v648
        %v666 = vadd.f32 %v607, %v651
        %v667 = vadd.f32 %v608, %v654
        %v668 = vadd.f32 %v609, %v657
        %v669 = vadd.f32 %v610, %v660
        %v670 = vadd.f32 %v611, %v663
        %vm671 = vcmask 23552
        %v672 = vsel %vm671, %v665, -inf
        %v673 = vsel %vm671, %v666, -inf
        %v674 = vsel %vm671, %v667, -inf
        %v675 = vsel %vm671, %v668, -inf
        %v676 = vsel %vm671, %v669, -inf
        %v677 = vmax.f32 %v672, %v676
        %v678 = vsel %vm671, %v670, -inf
        %v679 = vmax.f32 %v673, %v678
        %v680 = vmax.f32 %v677, %v679
        %v681 = vmax.f32 %v674, %v675
        %v682 = vmax.f32 %v680, %v681
        %v683 = vrot.slane %v682, 4
        %v684 = vmax.f32 %v682, %v683
        %v685 = vrot.slane %v684, 2
        %v686 = vmax.f32 %v684, %v685
        %v687 = vrot.slane %v686, 1
        %v688 = vmax.f32 %v686, %v687
        %v689 = vsub.f32 %v665, %v688
        %v690 = vsub.f32 %v666, %v688
        %v691 = vsub.f32 %v667, %v688
        %v692 = vsub.f32 %v668, %v688
        %v693 = vsub.f32 %v669, %v688
        %v694 = vsub.f32 %v670, %v688
        %v695 = vmul.f32 %v689, 1.442695
        %v696 = vpow.pop %v695
        %v697 = vmul.f32 %v690, 1.442695
        %v698 = vpow.pop %v697
        %v699 = vmul.f32 %v691, 1.442695
        %v700 = vpow.pop %v699
        %v701 = vmul.f32 %v692, 1.442695
        %v702 = vpow.pop %v701
        %v703 = vmul.f32 %v693, 1.442695
        %v704 = vpow.pop %v703
        %v705 = vmul.f32 %v694, 1.442695
        %v706 = vpow.pop %v705
        %vm707 = vcmask 392192
        %v709 = vsel %vm707, %v442, 0
        %v712 = vsel %vm707, %v443, 0
        %714 = vmatpush.msra.mxu0 0.0
        %715 = vmatpush.msra.mxu0 0.0
        %716 = vmatpush.msra.mxu0 0.0
        %717 = vmatpush.msra.mxu0 0.0
        %718 = vmatpush.msra.mxu0 0.0
        %719 = vmatpush.msra.mxu0 0.0
        %720 = vmatpush.msra.mxu0 0.0
        %721 = vmatpush.msra.mxu0 0.0
        %722 = vmatpush.msra.mxu0 0.0
        %723 = vmatpush.msra.mxu0 0.0
        %724 = vmatpush.msra.mxu0 %v706
        %725 = vmatpush.msra.mxu0 %v704
        %726 = vmatpush.msra.mxu0 %v702
        %727 = vmatpush.msra.mxu0 %v700
        %728 = vmatpush.msra.mxu0 %v698
        %729 = vmatpush.msra.mxu0 %v696
        %730 = vmatmul.f32.gmra.mxu0 %v709
        %v731 = vpop.f32.mrf.mxu0
        %v732 = vadd.f32 0.0, %v731
        %733 = vmatmul.f32.gmra.mxu0 %v712
        %v734 = vpop.f32.mrf.mxu0
        %v735 = vadd.f32 0.0, %v734
        %736 = vdwg.mxu0
        %737 = vmatpush.msra.mxu0 0.0
        %738 = vmatpush.msra.mxu0 0.0
        %739 = vmatpush.msra.mxu0 0.0
        %740 = vmatpush.msra.mxu0 0.0
        %741 = vmatpush.msra.mxu0 %v485
        %742 = vmatpush.msra.mxu0 %v484
        %743 = vmatpush.msra.mxu0 %v483
        %744 = vmatpush.msra.mxu0 %v482
        %745 = vmatpush.msra.mxu0 %v481
        %746 = vmatpush.msra.mxu0 %v480
        %747 = vmatpush.msra.mxu0 %v479
        %748 = vmatpush.msra.mxu0 %v478
        %749 = vmatpush.msra.mxu0 %v477
        %750 = vmatpush.msra.mxu0 %v476
        %751 = vmatpush.msra.mxu0 %v475
        %752 = vmatpush.msra.mxu0 %v474
        %753 = vmatmul.f32.gmra.mxu0 %v501
        %v754 = vpop.f32.mrf.mxu0
        %v755 = vadd.f32 0.0, %v754
        %756 = vmatmul.f32.gmra.mxu0 %v504
        %v757 = vpop.f32.mrf.mxu0
        %v758 = vadd.f32 0.0, %v757
        %759 = vdwg.mxu0
        %760 = vmatpush.msra.mxu0 0.0
        %761 = vmatpush.msra.mxu0 0.0
        %762 = vmatpush.msra.mxu0 0.0
        %763 = vmatpush.msra.mxu0 0.0
        %764 = vmatpush.msra.mxu0 0.0
        %765 = vmatpush.msra.mxu0 0.0
        %766 = vmatpush.msra.mxu0 0.0
        %767 = vmatpush.msra.mxu0 0.0
        %768 = vmatpush.msra.mxu0 0.0
        %769 = vmatpush.msra.mxu0 0.0
        %770 = vmatpush.msra.mxu0 0.0
        %771 = vmatpush.msra.mxu0 0.0
        %772 = vmatpush.msra.mxu0 0.0
        %773 = vmatpush.msra.mxu0 0.0
        %774 = vmatpush.msra.mxu0 %v758
        %775 = vmatpush.msra.mxu0 %v755
        %776 = vmatmul.f32.gmra.mxu0 %v613
        %v777 = vpop.f32.mrf.mxu0
        %v778 = vadd.f32 0.0, %v777
        %779 = vmatmul.f32.gmra.mxu0 %v616
        %v780 = vpop.f32.mrf.mxu0
        %v781 = vadd.f32 0.0, %v780
        %782 = vmatmul.f32.gmra.mxu0 %v619
        %v783 = vpop.f32.mrf.mxu0
        %v784 = vadd.f32 0.0, %v783
        %785 = vmatmul.f32.gmra.mxu0 %v622
        %v786 = vpop.f32.mrf.mxu0
        %v787 = vadd.f32 0.0, %v786
        %788 = vmatmul.f32.gmra.mxu0 %v625
        %v789 = vpop.f32.mrf.mxu0
        %v790 = vadd.f32 0.0, %v789
        %791 = vmatmul.f32.gmra.mxu0 %v628
        %v792 = vpop.f32.mrf.mxu0
        %v793 = vadd.f32 0.0, %v792
        %794 = vdwg.mxu0
        %v796 = vsel %vm671, %v696, 0
        %v799 = vsel %vm671, %v698, 0
        %v802 = vsel %vm671, %v700, 0
        %v805 = vsel %vm671, %v702, 0
        %v808 = vsel %vm671, %v704, 0
        %v811 = vsel %vm671, %v706, 0
        %vm813 = vcmask 1042432
        %v815 = vsel %vm813, %v498, 0
        %817 = vmatpush.msra.mxu0 0.0
        %818 = vmatpush.msra.mxu0 0.0
        %819 = vmatpush.msra.mxu0 0.0
        %820 = vmatpush.msra.mxu0 0.0
        %821 = vmatpush.msra.mxu0 0.0
        %822 = vmatpush.msra.mxu0 0.0
        %823 = vmatpush.msra.mxu0 0.0
        %824 = vmatpush.msra.mxu0 0.0
        %825 = vmatpush.msra.mxu0 0.0
        %826 = vmatpush.msra.mxu0 0.0
        %827 = vmatpush.msra.mxu0 0.0
        %828 = vmatpush.msra.mxu0 0.0
        %829 = vmatpush.msra.mxu0 0.0
        %830 = vmatpush.msra.mxu0 0.0
        %831 = vmatpush.msra.mxu0 0.0
        %832 = vmatpush.msra.mxu0 %v815
        %833 = vmatmul.f32.gmra.mxu0 %v796
        %v834 = vpop.f32.mrf.mxu0
        %v835 = vadd.f32 0.0, %v834
        %836 = vmatmul.f32.gmra.mxu0 %v799
        %v837 = vpop.f32.mrf.mxu0
        %v838 = vadd.f32 0.0, %v837
        %839 = vmatmul.f32.gmra.mxu0 %v802
        %v840 = vpop.f32.mrf.mxu0
        %v841 = vadd.f32 0.0, %v840
        %842 = vmatmul.f32.gmra.mxu0 %v805
        %v843 = vpop.f32.mrf.mxu0
        %v844 = vadd.f32 0.0, %v843
        %845 = vmatmul.f32.gmra.mxu0 %v808
        %v846 = vpop.f32.mrf.mxu0
        %v847 = vadd.f32 0.0, %v846
        %848 = vmatmul.f32.gmra.mxu0 %v811
        %v849 = vpop.f32.mrf.mxu0
        %v850 = vadd.f32 0.0, %v849
        %851 = vdwg.mxu0
        %v852 = vmul.f32 %v835, %v492
        %v853 = vmul.f32 %v838, %v493
        %v854 = vmul.f32 %v841, %v494
        %v855 = vmul.f32 %v844, %v495
        %v856 = vmul.f32 %v847, %v496
        %v857 = vmul.f32 %v850, %v497
        %v858 = vmul.f32 %v852, %v778
        %v859 = vmul.f32 %v853, %v781
        %v860 = vmul.f32 %v854, %v784
        %v861 = vmul.f32 %v855, %v787
        %v862 = vmul.f32 %v856, %v790
        %v863 = vmul.f32 %v857, %v793
        %864 = vmatpush.msra.mxu0 0.0
        %865 = vmatpush.msra.mxu0 0.0
        %866 = vmatpush.msra.mxu0 0.0
        %867 = vmatpush.msra.mxu0 0.0
        %868 = vmatpush.msra.mxu0 0.0
        %869 = vmatpush.msra.mxu0 0.0
        %870 = vmatpush.msra.mxu0 0.0
        %871 = vmatpush.msra.mxu0 0.0
        %872 = vmatpush.msra.mxu0 0.0
        %873 = vmatpush.msra.mxu0 0.0
        %874 = vmatpush.msra.mxu0 %v863
        %875 = vmatpush.msra.mxu0 %v862
        %876 = vmatpush.msra.mxu0 %v861
        %877 = vmatpush.msra.mxu0 %v860
        %878 = vmatpush.msra.mxu0 %v859
        %879 = vmatpush.msra.mxu0 %v858
        %880 = vmatmul.f32.gmra.mxu0 %v709
        %v881 = vpop.f32.mrf.mxu0
        %v882 = vadd.f32 0.0, %v881
        %883 = vmatmul.f32.gmra.mxu0 %v712
        %v884 = vpop.f32.mrf.mxu0
        %v885 = vadd.f32 0.0, %v884
        %886 = vdwg.mxu0
        %vm887 = vcmp.gt.f32.partialorder %v732, 0.0
        %vm888 = vcmp.gt.f32.partialorder %v735, 0.0
        %v889 = vsel %vm887, %v732, 1.0
        %v890 = vsel %vm888, %v735, 1.0
        %v891 = vrcp.pop %v889
        %v892 = vrcp.pop %v890
        %v894 = vsel %vm671, %v891, 0
        %v897 = vsel %vm671, %v892, 0
        %899 = vmatpush.msra.mxu0 0.0
        %900 = vmatpush.msra.mxu0 0.0
        %901 = vmatpush.msra.mxu0 0.0
        %902 = vmatpush.msra.mxu0 0.0
        %903 = vmatpush.msra.mxu0 0.0
        %904 = vmatpush.msra.mxu0 0.0
        %905 = vmatpush.msra.mxu0 0.0
        %906 = vmatpush.msra.mxu0 0.0
        %907 = vmatpush.msra.mxu0 0.0
        %908 = vmatpush.msra.mxu0 0.0
        %909 = vmatpush.msra.mxu0 0.0
        %910 = vmatpush.msra.mxu0 0.0
        %911 = vmatpush.msra.mxu0 0.0
        %912 = vmatpush.msra.mxu0 0.0
        %913 = vmatpush.msra.mxu0 0.0
        %914 = vmatpush.msra.mxu0 %v815
        %915 = vmatmul.f32.gmra.mxu0 %v894
        %v916 = vpop.f32.mrf.mxu0
        %v917 = vadd.f32 0.0, %v916
        %918 = vmatmul.f32.gmra.mxu0 %v897
        %v919 = vpop.f32.mrf.mxu0
        %v920 = vadd.f32 0.0, %v919
        %921 = vdwg.mxu0
        %v922 = vmul.f32 %v882, %v917
        %v923 = vmul.f32 %v885, %v920
        %p924 = scmp.eq.s32.totalorder %s22, 1
        // Predicated region
        $region129: #{tpu_custom_call.1} parent=43 // pred_check
          %p925 = pneg %p924
        $region130: #{tpu_custom_call.1} parent=43 // pred_check_branch
          %927 = sbr.rel (%p925) target = $region132
        $region131: #{tpu_custom_call.1} parent=43 // pred_region
          %928 = vst.msk [vmem:[#allocation6] sm:$0xff] %vm499, %v922
          %929 = vst.msk [vmem:[#allocation6 + $0x8] sm:$0xff] %vm499, %v923
        $region132: #{tpu_custom_call.1} parent=43 // pred_fallthru
          _
        %p930 = scmp.lt.s32.totalorder %s22, 1
        // Predicated region
        $region133: #{tpu_custom_call.1} parent=43 // pred_check
          %p931 = pneg %p930
        $region134: #{tpu_custom_call.1} parent=43 // pred_check_branch
          %933 = sbr.rel (%p931) target = $region136
        $region135: #{tpu_custom_call.1} parent=43 // pred_region
          %v934 = vmax.f32 %v922, 0.0
          %v935 = vmax.f32 %v923, 0.0
          %v936 = vadd.f32 %v434, %v934
          %v937 = vadd.f32 %v435, %v935
          %938 = vst.msk [vmem:[#allocation2] sm:$0xff] %vm499, %v936
          %939 = vst.msk [vmem:[#allocation2 + $0x8] sm:$0xff] %vm499, %v937
        $region136: #{tpu_custom_call.1} parent=43 // pred_fallthru
          _
        // Predicated region
        $region137: #{tpu_custom_call.1} parent=43 // pred_check
          %p940 = pneg %p186
        $region138: #{tpu_custom_call.1} parent=43 // pred_check_branch
          %942 = sbr.rel (%p940) target = $region140
        $region139: #{tpu_custom_call.1} parent=43 // pred_region
          %944 = vsyncadd [#allocation7], 0
          %s945 = sshll.u32 [#allocation6], 4
          %s946 = int_to_ptr.vmem [resolvable:$true] %s945
          %s947 = sshll.u32 %s10, 4
          %s948 = int_to_ptr.hbm [resolvable:$true] %s947
          %953 = dma.vmem_to_hbm [thread:$0]  %s946, 256, %s948, [#allocation7], 128, 128, 8
        $region140: #{tpu_custom_call.1} parent=43 // pred_fallthru
          _
        // Predicated region
        $region141: #{tpu_custom_call.1} parent=43 // pred_check
          %p954 = pneg %p186
        $region142: #{tpu_custom_call.1} parent=43 // pred_check_branch
          %956 = sbr.rel (%p954) target = $region144
        $region143: #{tpu_custom_call.1} parent=43 // pred_region
          %958 = dma.done [#allocation7], 256
        $region144: #{tpu_custom_call.1} parent=43 // pred_fallthru
          _
      $region44: #{tpu_custom_call.1} parent=5 // pred_fallthru
        _
      %p959 = scmp.le.s32.totalorder 2, %s17
      // Predicated region
      $region145: #{tpu_custom_call.1} parent=5 // pred_check
        %p960 = pneg %p959
      $region146: #{tpu_custom_call.1} parent=5 // pred_check_branch
        %962 = sbr.rel (%p960) target = $region148
      $region147: #{tpu_custom_call.1} parent=5 // pred_region
        %s963 = ssub.s32 %s17, 2
      $region148: #{tpu_custom_call.1} parent=5 // pred_fallthru
        _
    $region6: #{tpu_custom_call.1} parent=1 // loop_footer
      %s21 = sadd.s32 1, %s17
    $region7: #{tpu_custom_call.1} parent=1 // loop_footer_branch
      %16 = sbr.rel target = $region3
    $region8: #{tpu_custom_call.1} parent=1 // loop_exit
      _
    %964 = vsyncpa [#allocation7], 1
    %s965 = scalar_lea.sflag [#allocation7], 1
    %966 = vsyncpa %s965, 1

</llo_original>
